<compile_context>
chip_gen: v7x
topology: tpu7x:2x2x1
jax: 0.10.0
libtpu: 0.0.40
codegen_flags: <defaults>
</compile_context>

<pallas_src>
import jax
import jax.numpy as jnp
from jax.experimental import pallas as pl
from jax.experimental.pallas import tpu as pltpu


# ----------------------------------------------------------------------------
# Small-batch (default) path: gridless, untransposed, VPU-only.
# ----------------------------------------------------------------------------
def _linear_rowmajor_kernel(x_ref, w_ref, b_ref, y_ref):
    # x_ref: (B, IN)     f32 VMEM
    # w_ref: (IN*OUT,)   f32 SMEM   (w_ref[i*OUT + o] = weight for in-feat i, out-feat o)
    # b_ref: (OUT,)      f32 SMEM
    # y_ref: (B, OUT)    f32 VMEM
    B, IN = x_ref.shape
    OUT = y_ref.shape[1]
    cols = []
    for o in range(OUT):                       # static unroll (OUT is tiny)
        acc = jnp.full((B, 1), b_ref[o], dtype=jnp.float32)
        for i in range(IN):                    # static unroll (IN == 2)
            xi = x_ref[:, i:i + 1]
            if xi.dtype != jnp.float32:
                xi = xi.astype(jnp.float32)
            acc = acc + xi * w_ref[i * OUT + o]
        cols.append(acc)
    out = cols[0] if OUT == 1 else jnp.concatenate(cols, axis=1)
    y_ref[...] = out.astype(y_ref.dtype)


def mathnet_forward(x, w, b):
    """y = x @ w + b  (torch nn.Linear(IN, OUT) with w = torch_weight.T).

    x: (B, IN) float32, w: (IN, OUT) float32, b: (OUT,) float32 -> (B, OUT).
    No wrapper-side transposes; weights/bias live in SMEM.
    """
    B, IN = x.shape
    OUT = w.shape[1]
    return pl.pallas_call(
        _linear_rowmajor_kernel,
        out_shape=jax.ShapeDtypeStruct((B, OUT), x.dtype),
        in_specs=[
            pl.BlockSpec(memory_space=pltpu.MemorySpace.VMEM),   # x (B, IN)
            pl.BlockSpec(memory_space=pltpu.MemorySpace.SMEM),   # weights
            pl.BlockSpec(memory_space=pltpu.MemorySpace.SMEM),   # bias
        ],
        out_specs=pl.BlockSpec(memory_space=pltpu.MemorySpace.VMEM),
    )(x, w.reshape(IN * OUT), b.reshape(OUT))


# ----------------------------------------------------------------------------
# Large-batch path: lane-tiled over the batch axis.  Expects x^T produced
# upstream (do NOT feed it `x.T` from a wrapper — that doubles HBM traffic).
# ----------------------------------------------------------------------------
def _linear_lane_kernel(xt_ref, w_ref, b_ref, yt_ref):
    # xt_ref: (IN, TB)   f32 VMEM  -- batch on the 128-lane axis (TB % 128 == 0)
    # w_ref : (IN*OUT,)  f32 SMEM
    # b_ref : (OUT,)     f32 SMEM
    # yt_ref: (OUT, TB)  f32 VMEM  -- unmasked, lane-dense vst
    IN, TB = xt_ref.shape
    OUT = yt_ref.shape[0]
    rows = []
    for o in range(OUT):
        acc = jnp.full((1, TB), b_ref[o], dtype=jnp.float32)
        for i in range(IN):
            xi = xt_ref[i:i + 1, :]
            if xi.dtype != jnp.float32:
                xi = xi.astype(jnp.float32)
            acc = acc + xi * w_ref[i * OUT + o]
        rows.append(acc)
    out = rows[0] if OUT == 1 else jnp.concatenate(rows, axis=0)
    yt_ref[...] = out.astype(yt_ref.dtype)


def mathnet_forward_lane_tiled(xt, w, b, *, tb=128, vmem_limit_bytes=None):
    """y^T = (x @ w + b)^T for large B.

    xt: (IN, B) float32 with B % tb == 0 and tb % 128 == 0 (x^T produced by an
    upstream/fused producer), w: (IN, OUT), b: (OUT,).  Returns (OUT, B).

    Per-generation sizing (per buffer = IN*tb*4 bytes, double-buffered):
      v7x: tb ~256K-512K elems (>=2-4 MiB blocks), keep 2*(in+out) < 32 MiB scoped VMEM.
      v6e: biggest tb within 32 MiB scoped VMEM (~>=1 MiB blocks -> ~85% HBM roofline).
      v5e: scoped-VMEM default is 16 MiB — cap tb or pass vmem_limit_bytes.
    """
    IN, B = xt.shape
    OUT = w.shape[1]
    assert tb % 128 == 0 and B % tb == 0, "batch must tile into multiples of 128"
    return pl.pallas_call(
        _linear_lane_kernel,
        out_shape=jax.ShapeDtypeStruct((OUT, B), xt.dtype),
        grid=(B // tb,),
        in_specs=[
            pl.BlockSpec((IN, tb), lambda i: (0, i)),            # x^T tile
            pl.BlockSpec(memory_space=pltpu.MemorySpace.SMEM),   # weights
            pl.BlockSpec(memory_space=pltpu.MemorySpace.SMEM),   # bias
        ],
        out_specs=pl.BlockSpec((OUT, tb), lambda i: (0, i)),
        compiler_params=pltpu.CompilerParams(
            dimension_semantics=("parallel",),          # megacore shard on v7x
            vmem_limit_bytes=vmem_limit_bytes,
        ),
    )(xt, w.reshape(IN * OUT), b.reshape(OUT))


if __name__ == "__main__":
    key = jax.random.PRNGKey(0)
    kx, kw, kb, kx2 = jax.random.split(key, 4)

    B, IN, OUT = 8, 2, 1   # nn.Linear(2, 1); small batch of 8

    # Deterministic init mimicking PyTorch's uniform(-1/sqrt(IN), 1/sqrt(IN)).
    bound = 1.0 / jnp.sqrt(jnp.float32(IN))
    w = jax.random.uniform(kw, (IN, OUT), jnp.float32, -bound, bound)  # = torch weight.T
    b = jax.random.uniform(kb, (OUT,), jnp.float32, -bound, bound)

    # --- small-batch default path (no wrapper transposes) ---
    x = jax.random.normal(kx, (B, IN), jnp.float32)
    y = jax.block_until_ready(mathnet_forward(x, w, b))
    y_ref = x @ w + b
    assert y.shape == (B, OUT)
    assert jnp.allclose(y, y_ref, atol=1e-5, rtol=1e-5)

    # --- lane-tiled large-batch path (x^T comes from "upstream") ---
    B2, TB = 256, 128
    xt2 = jax.random.normal(kx2, (IN, B2), jnp.float32)   # produced transposed upstream
    yt2 = jax.block_until_ready(mathnet_forward_lane_tiled(xt2, w, b, tb=TB))
    yt2_ref = (xt2.T @ w + b).T
    assert yt2.shape == (OUT, B2)
    assert jnp.allclose(yt2, yt2_ref, atol=1e-5, rtol=1e-5)

    print("KERNEL_OK")
</pallas_src>

<mosaic_0001>
module attributes {stable_mosaic.version = 11 : i64} {
  func.func @_linear_rowmajor_kernel(%arg0: memref<8x2xf32, #tpu.memory_space<vmem>>, %arg1: memref<2xf32, #tpu.memory_space<smem>>, %arg2: memref<1xf32, #tpu.memory_space<smem>>, %arg3: memref<8x1xf32, #tpu.memory_space<vmem>>) attributes {dimension_semantics = [], scalar_prefetch = 0 : i64, scratch_operands = 0 : i64, tpu.core_type = #tpu.core_type<tc>} {
    %c0 = arith.constant 0 : index
    %0 = memref.load %arg2[%c0] : memref<1xf32, #tpu.memory_space<smem>>
    %1 = vector.broadcast %0 : f32 to vector<8x1xf32>
    %c0_0 = arith.constant 0 : index
    %c0_1 = arith.constant 0 : index
    %2 = vector.load %arg0[%c0_0, %c0_1] : memref<8x2xf32, #tpu.memory_space<vmem>>, vector<8x1xf32>
    %c0_2 = arith.constant 0 : index
    %3 = memref.load %arg1[%c0_2] : memref<2xf32, #tpu.memory_space<smem>>
    %4 = vector.broadcast %3 : f32 to vector<8x1xf32>
    %5 = arith.mulf %2, %4 : vector<8x1xf32>
    %6 = arith.addf %1, %5 : vector<8x1xf32>
    %c0_3 = arith.constant 0 : index
    %c1 = arith.constant 1 : index
    %7 = vector.load %arg0[%c0_3, %c1] : memref<8x2xf32, #tpu.memory_space<vmem>>, vector<8x1xf32>
    %c1_4 = arith.constant 1 : index
    %8 = memref.load %arg1[%c1_4] : memref<2xf32, #tpu.memory_space<smem>>
    %9 = vector.broadcast %8 : f32 to vector<8x1xf32>
    %10 = arith.mulf %7, %9 : vector<8x1xf32>
    %11 = arith.addf %6, %10 : vector<8x1xf32>
    %c0_5 = arith.constant 0 : index
    %c0_6 = arith.constant 0 : index
    %12 = vector.load %arg3[%c0_5, %c0_6] : memref<8x1xf32, #tpu.memory_space<vmem>>, vector<8x1xf32>
    tpu.vector_store %arg3[%c0_5, %c0_6], %11 {strides = array<i32>} : memref<8x1xf32, #tpu.memory_space<vmem>>, vector<8x1xf32>,
    return
  }
}

</mosaic_0001>

<llo_original>
// kernel: tpu_custom_call.1
$region0: #{tpu_custom_call.1}
  #allocation0 [shape = 'u32[]', space=smem, size = 0x4, offset = 0x4, fixed_abs, tag = 'smem constant byte address 0x4 - core index']
  #allocation1 [shape = 'u32[144,128]{1,0:T(1,128)}', space=vmem, size = 0x12000, scoped, tag = 'internal scratch']
  #allocation2 [shape = 'f32[1]{0:T(128)S(6)}', space=smem, size = 0x200, scoped, tag = 'scoped memory for tpu_custom_call.1']
  %s0 = inlined_call_operand.vmem [shape: f32[8,2], index: 0, kind: input, shape index: {}]
  %s1 = inlined_call_operand.vmem [shape: f32[2], index: 1, kind: input, shape index: {}]
  %s2 = inlined_call_operand.<no memory space> [shape: f32[1], index: 2, kind: input, shape index: {}]
  %s3 = inlined_call_operand.vmem [shape: f32[8,1], index: 3, kind: output, shape index: {}]
  %s4 = sld [smem:[#allocation0]]
  $region26: #{tpu_custom_call.1} parent=0
    _
  %s6 = ssub.s32 1, %s4
  %s7 = scalar_select 0, %s6, %s4
  %8 = sst [smem:[#allocation2]] %s2
  $region1: #{tpu_custom_call.1} parent=0
    #allocation3 [shape = 'u8[512]{0}', space=smem, size = 0x200, scoped, tag = 'input window, operand 1, single buffered']
    #allocation4 [shape = 's32[1]{0}', space=sflag, size = 0x4, scoped, tag = 'scoped memory for tpu_custom_call.1']
    %9 = vsyncpa [#allocation4], 0
    // Predicated region
    $region2: #{tpu_custom_call.1} parent=1 // pred_check
      _
    $region3: #{tpu_custom_call.1} parent=1 // pred_check_branch
      %11 = sbr.rel (0) target = $region5
    $region4: #{tpu_custom_call.1} parent=1 // pred_region
      _
    $region5: #{tpu_custom_call.1} parent=1 // pred_fallthru
      _
    // Predicated region
    $region6: #{tpu_custom_call.1} parent=1 // pred_check
      _
    $region7: #{tpu_custom_call.1} parent=1 // pred_check_branch
      %13 = sbr.rel (0) target = $region9
    $region8: #{tpu_custom_call.1} parent=1 // pred_region
      %s15 = ssub.s32 16, 16
      %16 = vsyncadd [#allocation4], %s15
      %s18 = sshll.u32 %s1, 4
      %s19 = int_to_ptr.vmem [resolvable:$true] %s18
      %21 = dma.vmem_to_smem %s19, 16, [#allocation3], [#allocation4]
    $region9: #{tpu_custom_call.1} parent=1 // pred_fallthru
      _
    // Predicated region
    $region10: #{tpu_custom_call.1} parent=1 // pred_check
      _
    $region11: #{tpu_custom_call.1} parent=1 // pred_check_branch
      %23 = sbr.rel (0) target = $region13
    $region12: #{tpu_custom_call.1} parent=1 // pred_region
      _
    $region13: #{tpu_custom_call.1} parent=1 // pred_fallthru
      _
    // Predicated region
    $region14: #{tpu_custom_call.1} parent=1 // pred_check
      _
    $region15: #{tpu_custom_call.1} parent=1 // pred_check_branch
      %25 = sbr.rel (0) target = $region17
    $region16: #{tpu_custom_call.1} parent=1 // pred_region
      %26 = dma.done [#allocation4], 16
    $region17: #{tpu_custom_call.1} parent=1 // pred_fallthru
      _
    %27 = sfence
    %s28 = sld [smem:[#allocation2]]
    %v29 = vstv %s28
    %v30 = vld [vmem:[%s0] sm:$0xff]
    %s31 = sld [smem:[#allocation3]]
    %v32 = vstv %s31
    %v33 = vmul.f32 %v30, %v32
    %v34 = vadd.f32 %v29, %v33
    %s35 = sld [smem:[#allocation3 + $0x1]]
    %v36 = vstv %s35
    %v37 = vmul.f32 %v30, %v36
    %39 = vrot.lane.b32.xlu0 %v37, 127
    %v40 = vpop.permute.xlu0 %39
    %v42 = vadd.f32 %v34, %v40
    %vm43 = vcmask 7168
    %44 = vst.msk [vmem:[%s3] sm:$0xff] %vm43, %v42
    // Predicated region
    $region18: #{tpu_custom_call.1} parent=1 // pred_check
      _
    $region19: #{tpu_custom_call.1} parent=1 // pred_check_branch
      %46 = sbr.rel (0) target = $region21
    $region20: #{tpu_custom_call.1} parent=1 // pred_region
      _
    $region21: #{tpu_custom_call.1} parent=1 // pred_fallthru
      _
    // Predicated region
    $region22: #{tpu_custom_call.1} parent=1 // pred_check
      _
    $region23: #{tpu_custom_call.1} parent=1 // pred_check_branch
      %48 = sbr.rel (0) target = $region25
    $region24: #{tpu_custom_call.1} parent=1 // pred_region
      _
    $region25: #{tpu_custom_call.1} parent=1 // pred_fallthru
      _
    %49 = vsyncpa [#allocation4], 1

</llo_original>
